<compile_context>
chip_gen: v7x
topology: tpu7x:2x2x1
jax: 0.10.0
libtpu: 0.0.40
codegen_flags: <defaults>
</compile_context>

<pallas_src>
import functools
import math

import jax
import jax.numpy as jnp
from jax import lax
from jax.experimental import pallas as pl
from jax.experimental.pallas import tpu as pltpu


def _qkv_attention_kernel(qkv_ref, out_ref, *, scale, compute_dtype,
                          fold_scale_low, approx_reciprocal):
    """One grid step = BH (batch, head) pairs.

    qkv_ref : (BH, 3, C, T) VMEM tile  (q/k/v stacked on axis 1)
    out_ref : (BH, C, T)    VMEM tile
    """
    q = qkv_ref[:, 0]          # (BH, C, T) -- static slices, zero cost
    k = qkv_ref[:, 1]
    v = qkv_ref[:, 2]

    # Fold the full 1/sqrt(C) into q once.  If the input already matches the
    # compute dtype and the scale is exact in it, skip the f32 round-trip.
    if fold_scale_low:
        q = q * jnp.asarray(scale, dtype=compute_dtype)
    else:
        q = (q.astype(jnp.float32) * scale).astype(compute_dtype)
    k = k.astype(compute_dtype)
    v = v.astype(compute_dtype)

    # weight[b,t,s] = sum_c q[b,c,t] * k[b,c,s]  -- contract C directly (no
    # transpose/relayout of either operand before the MXU), f32 accumulation.
    weight = lax.dot_general(
        q, k,
        dimension_numbers=(((1,), (1,)), ((0,), (0,))),
        preferred_element_type=jnp.float32)                   # (BH, T, T) f32

    # Numerically stable but UNNORMALIZED softmax; the denominator is
    # produced by the second matmul via a ones row appended to v.
    weight = jnp.exp(weight - jnp.max(weight, axis=-1, keepdims=True))
    weight = weight.astype(compute_dtype)

    bh, ch, t = v.shape
    v_aug = jnp.concatenate(
        [v, jnp.ones((bh, 1, t), dtype=compute_dtype)], axis=1)  # (BH, C+1, T)

    # a[b,c,t] = sum_s v_aug[b,c,s] * weight[b,t,s]  -- contract s against s,
    # result lands directly as (BH, C+1, T); row C is the softmax denominator
    # already in (BH, 1, T) lane orientation.
    a = lax.dot_general(
        v_aug, weight,
        dimension_numbers=(((2,), (2,)), ((0,), (0,))),
        preferred_element_type=jnp.float32)                   # (BH, C+1, T) f32

    denom = a[:, ch:ch + 1, :]
    if approx_reciprocal:
        inv = pl.reciprocal(denom, approx=True)                # EUP vrcp
    else:
        inv = 1.0 / denom
    out_ref[...] = (a[:, :ch, :] * inv).astype(out_ref.dtype)


def _tpu_generation_params():
    """(vmem_capacity, per-step budget, vmem_limit_bytes, tensorcores/chip).

    Physical VMEM capacity discriminates the generation: v7x has 64 MiB/TC
    and 2 TensorCores; v5e/v6e have 128 MiB and a single TensorCore.
    """
    vmem_cap = 128 * 1024 * 1024
    try:
        vmem_cap = int(pltpu.get_tpu_info().vmem_capacity_bytes)
    except Exception:
        pass
    if vmem_cap <= 64 * 1024 * 1024:      # v7x-class
        return vmem_cap, 16 * 1024 * 1024, 48 * 1024 * 1024, 2
    return vmem_cap, 48 * 1024 * 1024, 96 * 1024 * 1024, 1     # v5e / v6e


def _pick_heads_per_step(B, ch, T, in_dtype, compute_dtype, *,
                         budget_bytes, num_cores):
    """Largest divisor of B whose per-step VMEM footprint fits the budget.

    On multi-TensorCore parts, prefer a divisor whose step count is a
    multiple of the core count so the 'parallel' grid axis stays balanced.
    """
    in_sz = jnp.dtype(in_dtype).itemsize
    cd_sz = jnp.dtype(compute_dtype).itemsize
    per_head = (
        2 * 3 * ch * T * in_sz        # double-buffered fused qkv input block
        + 2 * ch * T * in_sz          # double-buffered output block
        + 2 * T * T * 4               # f32 logits + softmax temporary
        + T * T * cd_sz               # compute-dtype copy of the weights
        + 3 * (ch + 1) * T * cd_sz    # q / k / v(+ones row) in compute dtype
        + 2 * (ch + 1) * T * 4        # f32 result staging of 2nd matmul
    )
    cap = max(1, budget_bytes // max(per_head, 1))
    fitting = [d for d in range(1, B + 1) if B % d == 0 and d <= cap] or [1]
    if num_cores > 1:
        balanced = [d for d in fitting if (B // d) % num_cores == 0]
        if balanced:
            return max(balanced)
    return max(fitting)


def qkv_attention_legacy(qkv, n_heads, *, compute_dtype=jnp.bfloat16,
                         heads_per_step=None, approx_reciprocal=True):
    """Pallas implementation of QKVAttentionLegacy.forward.

    qkv: [N, H*3*C, T]  ->  returns [N, H*C, T]  (same dtype as input).
    MXU operands are cast to `compute_dtype` (bf16 by default); accumulation
    and the softmax max/exp stay in float32.
    """
    bs, width, length = qkv.shape
    assert width % (3 * n_heads) == 0
    ch = width // (3 * n_heads)
    B = bs * n_heads

    # q/k/v as tile-aligned slabs stacked along a size-3 axis -> one fused,
    # contiguous DMA per grid step.
    qkv_r = qkv.reshape(B, 3, ch, length)

    _, budget, vmem_limit, num_cores = _tpu_generation_params()

    if heads_per_step is None:
        heads_per_step = _pick_heads_per_step(
            B, ch, length, qkv.dtype, compute_dtype,
            budget_bytes=budget, num_cores=num_cores)
    bh = int(heads_per_step)
    assert B % bh == 0, (B, bh)

    scale = 1.0 / math.sqrt(ch)        # = (1/ch**0.25)**2, applied once to q
    fold_scale_low = (
        jnp.dtype(qkv.dtype) == jnp.dtype(compute_dtype)
        and float(jnp.asarray(scale, dtype=compute_dtype)) == scale)

    kernel = functools.partial(
        _qkv_attention_kernel,
        scale=scale,
        compute_dtype=compute_dtype,
        fold_scale_low=fold_scale_low,
        approx_reciprocal=approx_reciprocal,
    )

    out = pl.pallas_call(
        kernel,
        out_shape=jax.ShapeDtypeStruct((B, ch, length), qkv.dtype),
        grid=(B // bh,),
        in_specs=[
            pl.BlockSpec((bh, 3, ch, length), lambda b: (b, 0, 0, 0)),
        ],
        out_specs=pl.BlockSpec((bh, ch, length), lambda b: (b, 0, 0)),
        compiler_params=pltpu.CompilerParams(
            dimension_semantics=("parallel",),
            vmem_limit_bytes=vmem_limit,
        ),
    )(qkv_r)

    return out.reshape(bs, n_heads * ch, length)


def _reference(qkv, n_heads):
    """Pure-JAX float32 mirror of the PyTorch forward (ground truth)."""
    qkv = qkv.astype(jnp.float32)
    bs, width, length = qkv.shape
    ch = width // (3 * n_heads)
    x = qkv.reshape(bs * n_heads, 3 * ch, length)
    q, k, v = x[:, :ch], x[:, ch:2 * ch], x[:, 2 * ch:]
    scale = 1.0 / math.sqrt(math.sqrt(ch))
    w = jnp.einsum('bct,bcs->bts', q * scale, k * scale,
                   precision=lax.Precision.HIGHEST)
    w = jax.nn.softmax(w, axis=-1)
    a = jnp.einsum('bts,bcs->bct', w, v, precision=lax.Precision.HIGHEST)
    return a.reshape(bs, -1, length)


if __name__ == "__main__":
    # Small shapes: batch=2, heads=2, channels-per-head=16, seq length=128
    # => qkv width = H * 3 * C = 96.  B=4 heads total.
    N, H, C, T = 2, 2, 16, 128
    key = jax.random.PRNGKey(0)
    qkv_f32 = jax.random.normal(key, (N, H * 3 * C, T), dtype=jnp.float32)

    # --- float32 input, bf16 MXU operands / f32 softmax ---------------------
    out = jax.block_until_ready(qkv_attention_legacy(qkv_f32, n_heads=H))
    ref = _reference(qkv_f32, n_heads=H)
    assert out.shape == (N, H * C, T), out.shape
    err = jnp.abs(out.astype(jnp.float32) - ref)
    max_err, mean_err = float(err.max()), float(err.mean())
    # bf16-operand matmuls with f32 accumulation: expect O(1e-3) error.
    assert max_err < 5e-2 and mean_err < 1e-2, (max_err, mean_err)

    # --- bf16 input (the realistic diffusion-model path) --------------------
    qkv_bf16 = qkv_f32.astype(jnp.bfloat16)
    out16 = jax.block_until_ready(qkv_attention_legacy(qkv_bf16, n_heads=H))
    ref16 = _reference(qkv_bf16, n_heads=H)
    err16 = jnp.abs(out16.astype(jnp.float32) - ref16)
    max16, mean16 = float(err16.max()), float(err16.mean())
    assert max16 < 8e-2 and mean16 < 1.5e-2, (max16, mean16)

    print("KERNEL_OK")
</pallas_src>

<mosaic_0001>
module attributes {stable_mosaic.version = 11 : i64} {
  func.func @_qkv_attention_kernel(%arg0: i32, %arg1: memref<4x3x16x128xf32, #tpu.memory_space<vmem>>, %arg2: memref<4x16x128xf32, #tpu.memory_space<vmem>>) attributes {dimension_semantics = [#tpu.dimension_semantics<parallel>], iteration_bounds = array<i64: 1>, scalar_prefetch = 0 : i64, scratch_operands = 0 : i64, tpu.core_type = #tpu.core_type<tc>, window_params = [{transform_indices = @transform_0, window_bounds = array<i64: 4, 3, 16, 128>}, {transform_indices = @transform_1, window_bounds = array<i64: 4, 16, 128>}]} {
    %c0 = arith.constant 0 : index
    %c0_0 = arith.constant 0 : index
    %c0_1 = arith.constant 0 : index
    %c0_2 = arith.constant 0 : index
    %0 = vector.load %arg1[%c0, %c0_0, %c0_1, %c0_2] : memref<4x3x16x128xf32, #tpu.memory_space<vmem>>, vector<4x1x16x128xf32>
    %1 = vector.shape_cast %0 : vector<4x1x16x128xf32> to vector<4x16x128xf32>
    %c0_3 = arith.constant 0 : index
    %c1 = arith.constant 1 : index
    %c0_4 = arith.constant 0 : index
    %c0_5 = arith.constant 0 : index
    %2 = vector.load %arg1[%c0_3, %c1, %c0_4, %c0_5] : memref<4x3x16x128xf32, #tpu.memory_space<vmem>>, vector<4x1x16x128xf32>
    %3 = vector.shape_cast %2 : vector<4x1x16x128xf32> to vector<4x16x128xf32>
    %c0_6 = arith.constant 0 : index
    %c2 = arith.constant 2 : index
    %c0_7 = arith.constant 0 : index
    %c0_8 = arith.constant 0 : index
    %4 = vector.load %arg1[%c0_6, %c2, %c0_7, %c0_8] : memref<4x3x16x128xf32, #tpu.memory_space<vmem>>, vector<4x1x16x128xf32>
    %5 = vector.shape_cast %4 : vector<4x1x16x128xf32> to vector<4x16x128xf32>
    %cst = arith.constant 2.500000e-01 : f32
    %6 = vector.broadcast %cst : f32 to vector<4x16x128xf32>
    %7 = arith.mulf %1, %6 : vector<4x16x128xf32>
    %8 = arith.truncf %7 : vector<4x16x128xf32> to vector<4x16x128xbf16>
    %9 = arith.truncf %3 : vector<4x16x128xf32> to vector<4x16x128xbf16>
    %10 = arith.truncf %5 : vector<4x16x128xf32> to vector<4x16x128xbf16>
    %cst_9 = arith.constant dense<0.000000e+00> : vector<4x128x128xf32>
    %11 = tpu.matmul %8, %9, %cst_9 {dimension_numbers = #tpu.dot_dimension_numbers<[1], [1], [2], [2], [0, 0, 0, 2, 1, 2], [0], [0]>} : vector<4x16x128xbf16>, vector<4x16x128xbf16>, vector<4x128x128xf32> -> vector<4x128x128xf32>
    %cst_10 = arith.constant dense<0xFF800000> : vector<4x128xf32>
    %12 = vector.multi_reduction <maximumf>, %11, %cst_10 [2] : vector<4x128x128xf32> to vector<4x128xf32>
    %13 = vector.shape_cast %12 : vector<4x128xf32> to vector<4x128x1xf32>
    %14 = vector.broadcast %13 : vector<4x128x1xf32> to vector<4x128x128xf32>
    %15 = arith.subf %11, %14 : vector<4x128x128xf32>
    %16 = math.exp %15 : vector<4x128x128xf32>
    %17 = arith.truncf %16 : vector<4x128x128xf32> to vector<4x128x128xbf16>
    %cst_11 = arith.constant 1.000000e+00 : bf16
    %18 = vector.broadcast %cst_11 : bf16 to vector<4x1x128xbf16>
    %19 = tpu.concatenate %10, %18 in 1 : vector<4x16x128xbf16>, vector<4x1x128xbf16> -> vector<4x17x128xbf16>
    %cst_12 = arith.constant dense<0.000000e+00> : vector<4x17x128xf32>
    %20 = tpu.matmul %19, %17, %cst_12 {dimension_numbers = #tpu.dot_dimension_numbers<[2], [2], [1], [1], [0, 0, 0, 1, 1, 1], [0], [0]>} : vector<4x17x128xbf16>, vector<4x128x128xbf16>, vector<4x17x128xf32> -> vector<4x17x128xf32>
    %21 = vector.extract_strided_slice %20 {offsets = [0, 16, 0], sizes = [4, 1, 128], strides = [1, 1, 1]} : vector<4x17x128xf32> to vector<4x1x128xf32>
    %22 = tpu.reciprocal %21 {approx = true} : vector<4x1x128xf32> -> vector<4x1x128xf32>
    %23 = vector.extract_strided_slice %20 {offsets = [0, 0, 0], sizes = [4, 16, 128], strides = [1, 1, 1]} : vector<4x17x128xf32> to vector<4x16x128xf32>
    %24 = vector.broadcast %22 : vector<4x1x128xf32> to vector<4x16x128xf32>
    %25 = arith.mulf %23, %24 : vector<4x16x128xf32>
    %c0_13 = arith.constant 0 : index
    %c0_14 = arith.constant 0 : index
    %c0_15 = arith.constant 0 : index
    %26 = vector.load %arg2[%c0_13, %c0_14, %c0_15] : memref<4x16x128xf32, #tpu.memory_space<vmem>>, vector<4x16x128xf32>
    tpu.vector_store %arg2[%c0_13, %c0_14, %c0_15], %25 {strides = array<i32>} : memref<4x16x128xf32, #tpu.memory_space<vmem>>, vector<4x16x128xf32>,
    return
  }
  func.func @transform_0(%arg0: i32) -> (i32, i32, i32, i32) {
    %c0_i32 = arith.constant 0 : i32
    %c0_i32_0 = arith.constant 0 : i32
    %c0_i32_1 = arith.constant 0 : i32
    %c0_i32_2 = arith.constant 0 : i32
    return %arg0, %c0_i32, %c0_i32_0, %c0_i32_1 : i32, i32, i32, i32
  }
  func.func @transform_1(%arg0: i32) -> (i32, i32, i32) {
    %c0_i32 = arith.constant 0 : i32
    %c0_i32_0 = arith.constant 0 : i32
    %c0_i32_1 = arith.constant 0 : i32
    return %arg0, %c0_i32, %c0_i32_0 : i32, i32, i32
  }
}

</mosaic_0001>

<llo_original>
// kernel: tpu_custom_call.1
$region0: #{tpu_custom_call.1}
  #allocation0 [shape = 'u32[]', space=smem, size = 0x4, offset = 0x4, fixed_abs, tag = 'smem constant byte address 0x4 - core index']
  #allocation1 [shape = 'u32[144,128]{1,0:T(1,128)}', space=vmem, size = 0x12000, scoped, tag = 'internal scratch']
  %s0 = inlined_call_operand.hbm [shape: f32[4,3,16,128], index: 0, kind: input, shape index: {}]
  %s1 = inlined_call_operand.hbm [shape: f32[4,16,128], index: 1, kind: output, shape index: {}]
  %s2 = sld [smem:[#allocation0]]
  $region18: #{tpu_custom_call.1} parent=0
    _
  %s4 = ssub.s32 1, %s2
  %s5 = scalar_select 0, %s4, %s2
  $region1: #{tpu_custom_call.1} parent=0
    #allocation2 [shape = 'u8[98304]{0}', space=vmem, size = 0x18000, scoped, tag = 'input window, operand 0, single buffered']
    #allocation3 [shape = 's32[1]{0}', space=sflag, size = 0x4, scoped, tag = 'scoped memory for tpu_custom_call.1']
    #allocation4 [shape = 's32[1]{0}', space=sflag, size = 0x4, scoped, tag = 'scoped memory for tpu_custom_call.1']
    #allocation5 [shape = 'u8[32768]{0}', space=vmem, size = 0x8000, scoped, tag = 'output window, operand 0, single buffered']
    %6 = vsyncpa [#allocation3], 0
    %7 = vsyncpa [#allocation4], 0
    // Predicated region
    $region2: #{tpu_custom_call.1} parent=1 // pred_check
      _
    $region3: #{tpu_custom_call.1} parent=1 // pred_check_branch
      %9 = sbr.rel (0) target = $region5
    $region4: #{tpu_custom_call.1} parent=1 // pred_region
      %s11 = ssub.s32 3072, 3072
      %12 = vsyncadd [#allocation3], %s11
      %s13 = sshll.u32 [#allocation2], 4
      %s14 = int_to_ptr.vmem [resolvable:$true] %s13
      %19 = dma.hbm_to_vmem [thread:$0]  %s0, 3072, %s14, [#allocation3], 128, 128, 8
    $region5: #{tpu_custom_call.1} parent=1 // pred_fallthru
      _
    // Predicated region
    $region6: #{tpu_custom_call.1} parent=1 // pred_check
      _
    $region7: #{tpu_custom_call.1} parent=1 // pred_check_branch
      %21 = sbr.rel (0) target = $region9
    $region8: #{tpu_custom_call.1} parent=1 // pred_region
      %22 = dma.done [#allocation3], 3072
    $region9: #{tpu_custom_call.1} parent=1 // pred_fallthru
      _
    %v25 = vld [vmem:[#allocation2] sm:$0xff]
    %v26 = vld [vmem:[#allocation2 + $0x8] sm:$0xff]
    %v27 = vld [vmem:[#allocation2 + $0x30] sm:$0xff]
    %v28 = vld [vmem:[#allocation2 + $0x38] sm:$0xff]
    %v29 = vld [vmem:[#allocation2 + $0x60] sm:$0xff]
    %v30 = vld [vmem:[#allocation2 + $0x68] sm:$0xff]
    %v31 = vld [vmem:[#allocation2 + $0x90] sm:$0xff]
    %v32 = vld [vmem:[#allocation2 + $0x98] sm:$0xff]
    %s33 = scalar_lea.vmem [#allocation2], 16
    %v34 = vld [vmem:[%s33] sm:$0xff]
    %v35 = vld [vmem:[%s33 + $0x8] sm:$0xff]
    %v36 = vld [vmem:[%s33 + $0x30] sm:$0xff]
    %v37 = vld [vmem:[%s33 + $0x38] sm:$0xff]
    %v38 = vld [vmem:[%s33 + $0x60] sm:$0xff]
    %v39 = vld [vmem:[%s33 + $0x68] sm:$0xff]
    %v40 = vld [vmem:[%s33 + $0x90] sm:$0xff]
    %v41 = vld [vmem:[%s33 + $0x98] sm:$0xff]
    %s42 = scalar_lea.vmem [#allocation2], 32
    %v43 = vld [vmem:[%s42] sm:$0xff]
    %v44 = vld [vmem:[%s42 + $0x8] sm:$0xff]
    %v45 = vld [vmem:[%s42 + $0x30] sm:$0xff]
    %v46 = vld [vmem:[%s42 + $0x38] sm:$0xff]
    %v47 = vld [vmem:[%s42 + $0x60] sm:$0xff]
    %v48 = vld [vmem:[%s42 + $0x68] sm:$0xff]
    %v49 = vld [vmem:[%s42 + $0x90] sm:$0xff]
    %v50 = vld [vmem:[%s42 + $0x98] sm:$0xff]
    %v51 = vmul.f32 %v25, 0.25
    %v52 = vmul.f32 %v26, 0.25
    %v53 = vmul.f32 %v27, 0.25
    %v54 = vmul.f32 %v28, 0.25
    %v55 = vmul.f32 %v29, 0.25
    %v56 = vmul.f32 %v30, 0.25
    %v57 = vmul.f32 %v31, 0.25
    %v58 = vmul.f32 %v32, 0.25
    %v59 = vpack.c.bf16 %v52, %v51
    %v60 = vpack.c.bf16 %v54, %v53
    %v61 = vpack.c.bf16 %v56, %v55
    %v62 = vpack.c.bf16 %v58, %v57
    %v63 = vpack.c.bf16 %v35, %v34
    %v64 = vpack.c.bf16 %v37, %v36
    %v65 = vpack.c.bf16 %v39, %v38
    %v66 = vpack.c.bf16 %v41, %v40
    %v67 = vpack.c.bf16 %v44, %v43
    %v68 = vpack.c.bf16 %v46, %v45
    %v69 = vpack.c.bf16 %v48, %v47
    %v70 = vpack.c.bf16 %v50, %v49
    %71 = vxpose.xlu0.c.b16.start [1/8] %v59, 128
    %72 = vxpose.xlu0.c.b16.cont [2/8] 0, 128
    %73 = vxpose.xlu0.c.b16.cont [3/8] 0, 128
    %74 = vxpose.xlu0.c.b16.cont [4/8] 0, 128
    %75 = vxpose.xlu0.c.b16.cont [5/8] 0, 128
    %76 = vxpose.xlu0.c.b16.cont [6/8] 0, 128
    %77 = vxpose.xlu0.c.b16.cont [7/8] 0, 128
    %78 = vxpose.xlu0.c.b16.end [8/8] 0, 128
    %v79 = vpop.trf.xlu0
    %v80 = vpop.trf.xlu0
    %v81 = vpop.trf.xlu0
    %v82 = vpop.trf.xlu0
    %v83 = vpop.trf.xlu0
    %v84 = vpop.trf.xlu0
    %v85 = vpop.trf.xlu0
    %v86 = vpop.trf.xlu0
    %vm87 = vcmask 130048
    %v89 = vsel %vm87, %v79, 0
    %v92 = vsel %vm87, %v80, 0
    %v95 = vsel %vm87, %v81, 0
    %v98 = vsel %vm87, %v82, 0
    %v101 = vsel %vm87, %v83, 0
    %v104 = vsel %vm87, %v84, 0
    %v107 = vsel %vm87, %v85, 0
    %v110 = vsel %vm87, %v86, 0
    %112 = vmatprep.subr.bf16.mxu0 0
    %113 = vmatpush1.bf16.msra.mxu0 %v63
    %114 = vmatprep.subr.bf16.mxu0 0
    %115 = vmatpush1.bf16.msra.mxu0 0
    %116 = vmatprep.subr.bf16.mxu0 0
    %117 = vmatpush1.bf16.msra.mxu0 0
    %118 = vmatprep.subr.bf16.mxu0 0
    %119 = vmatpush1.bf16.msra.mxu0 0
    %120 = vmatprep.subr.bf16.mxu0 0
    %121 = vmatpush1.bf16.msra.mxu0 0
    %122 = vmatprep.subr.bf16.mxu0 0
    %123 = vmatpush1.bf16.msra.mxu0 0
    %124 = vmatprep.subr.bf16.mxu0 0
    %125 = vmatpush1.bf16.msra.mxu0 0
    %126 = vmatprep.subr.bf16.mxu0 0
    %127 = vmatpush1.bf16.msra.mxu0 0
    %128 = vmatprep.subr.bf16.mxu0 0
    %129 = vmatpush1.bf16.msra.mxu0 0
    %130 = vmatprep.subr.bf16.mxu0 0
    %131 = vmatpush1.bf16.msra.mxu0 0
    %132 = vmatprep.subr.bf16.mxu0 0
    %133 = vmatpush1.bf16.msra.mxu0 0
    %134 = vmatprep.subr.bf16.mxu0 0
    %135 = vmatpush1.bf16.msra.mxu0 0
    %136 = vmatprep.subr.bf16.mxu0 0
    %137 = vmatpush1.bf16.msra.mxu0 0
    %138 = vmatprep.subr.bf16.mxu0 0
    %139 = vmatpush1.bf16.msra.mxu0 0
    %140 = vmatprep.subr.bf16.mxu0 0
    %141 = vmatpush1.bf16.msra.mxu0 0
    %142 = vmatprep.subr.bf16.mxu0 0
    %143 = vmatpush1.bf16.msra.mxu0 0
    %144 = vmatprep.mubr.bf16.mxu0 0
    %145 = vmatmul.mubr.bf16.gmra.mrb[0].mxu0 %v89
    %v146 = vpop.f32.mrb[0].mxu0
    %v147 = vadd.f32 0.0, %v146
    %v148 = vpop.f32.mrb[0].mxu0
    %v149 = vpop.f32.mrb[0].mxu0
    %v150 = vadd.f32 0.0, %v149
    %v151 = vpop.f32.mrb[0].mxu0
    %152 = vmatprep.mubr.bf16.mxu0 0
    %153 = vmatmul.mubr.bf16.gmra.mrb[0].mxu0 %v92
    %v154 = vpop.f32.mrb[0].mxu0
    %v155 = vadd.f32 0.0, %v154
    %v156 = vpop.f32.mrb[0].mxu0
    %v157 = vpop.f32.mrb[0].mxu0
    %v158 = vadd.f32 0.0, %v157
    %v159 = vpop.f32.mrb[0].mxu0
    %160 = vmatprep.mubr.bf16.mxu0 0
    %161 = vmatmul.mubr.bf16.gmra.mrb[0].mxu0 %v95
    %v162 = vpop.f32.mrb[0].mxu0
    %v163 = vadd.f32 0.0, %v162
    %v164 = vpop.f32.mrb[0].mxu0
    %v165 = vpop.f32.mrb[0].mxu0
    %v166 = vadd.f32 0.0, %v165
    %v167 = vpop.f32.mrb[0].mxu0
    %168 = vmatprep.mubr.bf16.mxu0 0
    %169 = vmatmul.mubr.bf16.gmra.mrb[0].mxu0 %v98
    %v170 = vpop.f32.mrb[0].mxu0
    %v171 = vadd.f32 0.0, %v170
    %v172 = vpop.f32.mrb[0].mxu0
    %v173 = vpop.f32.mrb[0].mxu0
    %v174 = vadd.f32 0.0, %v173
    %v175 = vpop.f32.mrb[0].mxu0
    %176 = vmatprep.mubr.bf16.mxu0 0
    %177 = vmatmul.mubr.bf16.gmra.mrb[0].mxu0 %v101
    %v178 = vpop.f32.mrb[0].mxu0
    %v179 = vadd.f32 0.0, %v178
    %v180 = vpop.f32.mrb[0].mxu0
    %v181 = vpop.f32.mrb[0].mxu0
    %v182 = vadd.f32 0.0, %v181
    %v183 = vpop.f32.mrb[0].mxu0
    %184 = vmatprep.mubr.bf16.mxu0 0
    %185 = vmatmul.mubr.bf16.gmra.mrb[0].mxu0 %v104
    %v186 = vpop.f32.mrb[0].mxu0
    %v187 = vadd.f32 0.0, %v186
    %v188 = vpop.f32.mrb[0].mxu0
    %v189 = vpop.f32.mrb[0].mxu0
    %v190 = vadd.f32 0.0, %v189
    %v191 = vpop.f32.mrb[0].mxu0
    %192 = vmatprep.mubr.bf16.mxu0 0
    %193 = vmatmul.mubr.bf16.gmra.mrb[0].mxu0 %v107
    %v194 = vpop.f32.mrb[0].mxu0
    %v195 = vadd.f32 0.0, %v194
    %v196 = vpop.f32.mrb[0].mxu0
    %v197 = vpop.f32.mrb[0].mxu0
    %v198 = vadd.f32 0.0, %v197
    %v199 = vpop.f32.mrb[0].mxu0
    %200 = vmatprep.mubr.bf16.mxu0 0
    %201 = vmatmul.mubr.bf16.gmra.mrb[0].mxu0 %v110
    %v202 = vpop.f32.mrb[0].mxu0
    %v203 = vadd.f32 0.0, %v202
    %v204 = vpop.f32.mrb[0].mxu0
    %v205 = vpop.f32.mrb[0].mxu0
    %v206 = vadd.f32 0.0, %v205
    %v207 = vpop.f32.mrb[0].mxu0
    %208 = vdwg.mxu0
    %209 = vxpose.xlu0.c.b16.start [1/8] %v60, 128
    %210 = vxpose.xlu0.c.b16.cont [2/8] 0, 128
    %211 = vxpose.xlu0.c.b16.cont [3/8] 0, 128
    %212 = vxpose.xlu0.c.b16.cont [4/8] 0, 128
    %213 = vxpose.xlu0.c.b16.cont [5/8] 0, 128
    %214 = vxpose.xlu0.c.b16.cont [6/8] 0, 128
    %215 = vxpose.xlu0.c.b16.cont [7/8] 0, 128
    %216 = vxpose.xlu0.c.b16.end [8/8] 0, 128
    %v217 = vpop.trf.xlu0
    %v218 = vpop.trf.xlu0
    %v219 = vpop.trf.xlu0
    %v220 = vpop.trf.xlu0
    %v221 = vpop.trf.xlu0
    %v222 = vpop.trf.xlu0
    %v223 = vpop.trf.xlu0
    %v224 = vpop.trf.xlu0
    %v226 = vsel %vm87, %v217, 0
    %v229 = vsel %vm87, %v218, 0
    %v232 = vsel %vm87, %v219, 0
    %v235 = vsel %vm87, %v220, 0
    %v238 = vsel %vm87, %v221, 0
    %v241 = vsel %vm87, %v222, 0
    %v244 = vsel %vm87, %v223, 0
    %v247 = vsel %vm87, %v224, 0
    %249 = vmatprep.subr.bf16.mxu0 0
    %250 = vmatpush1.bf16.msra.mxu0 %v64
    %251 = vmatprep.subr.bf16.mxu0 0
    %252 = vmatpush1.bf16.msra.mxu0 0
    %253 = vmatprep.subr.bf16.mxu0 0
    %254 = vmatpush1.bf16.msra.mxu0 0
    %255 = vmatprep.subr.bf16.mxu0 0
    %256 = vmatpush1.bf16.msra.mxu0 0
    %257 = vmatprep.subr.bf16.mxu0 0
    %258 = vmatpush1.bf16.msra.mxu0 0
    %259 = vmatprep.subr.bf16.mxu0 0
    %260 = vmatpush1.bf16.msra.mxu0 0
    %261 = vmatprep.subr.bf16.mxu0 0
    %262 = vmatpush1.bf16.msra.mxu0 0
    %263 = vmatprep.subr.bf16.mxu0 0
    %264 = vmatpush1.bf16.msra.mxu0 0
    %265 = vmatprep.subr.bf16.mxu0 0
    %266 = vmatpush1.bf16.msra.mxu0 0
    %267 = vmatprep.subr.bf16.mxu0 0
    %268 = vmatpush1.bf16.msra.mxu0 0
    %269 = vmatprep.subr.bf16.mxu0 0
    %270 = vmatpush1.bf16.msra.mxu0 0
    %271 = vmatprep.subr.bf16.mxu0 0
    %272 = vmatpush1.bf16.msra.mxu0 0
    %273 = vmatprep.subr.bf16.mxu0 0
    %274 = vmatpush1.bf16.msra.mxu0 0
    %275 = vmatprep.subr.bf16.mxu0 0
    %276 = vmatpush1.bf16.msra.mxu0 0
    %277 = vmatprep.subr.bf16.mxu0 0
    %278 = vmatpush1.bf16.msra.mxu0 0
    %279 = vmatprep.subr.bf16.mxu0 0
    %280 = vmatpush1.bf16.msra.mxu0 0
    %281 = vmatprep.mubr.bf16.mxu0 0
    %282 = vmatmul.mubr.bf16.gmra.mrb[0].mxu0 %v226
    %v283 = vpop.f32.mrb[0].mxu0
    %v284 = vadd.f32 0.0, %v283
    %v285 = vpop.f32.mrb[0].mxu0
    %v286 = vpop.f32.mrb[0].mxu0
    %v287 = vadd.f32 0.0, %v286
    %v288 = vpop.f32.mrb[0].mxu0
    %289 = vmatprep.mubr.bf16.mxu0 0
    %290 = vmatmul.mubr.bf16.gmra.mrb[0].mxu0 %v229
    %v291 = vpop.f32.mrb[0].mxu0
    %v292 = vadd.f32 0.0, %v291
    %v293 = vpop.f32.mrb[0].mxu0
    %v294 = vpop.f32.mrb[0].mxu0
    %v295 = vadd.f32 0.0, %v294
    %v296 = vpop.f32.mrb[0].mxu0
    %297 = vmatprep.mubr.bf16.mxu0 0
    %298 = vmatmul.mubr.bf16.gmra.mrb[0].mxu0 %v232
    %v299 = vpop.f32.mrb[0].mxu0
    %v300 = vadd.f32 0.0, %v299
    %v301 = vpop.f32.mrb[0].mxu0
    %v302 = vpop.f32.mrb[0].mxu0
    %v303 = vadd.f32 0.0, %v302
    %v304 = vpop.f32.mrb[0].mxu0
    %305 = vmatprep.mubr.bf16.mxu0 0
    %306 = vmatmul.mubr.bf16.gmra.mrb[0].mxu0 %v235
    %v307 = vpop.f32.mrb[0].mxu0
    %v308 = vadd.f32 0.0, %v307
    %v309 = vpop.f32.mrb[0].mxu0
    %v310 = vpop.f32.mrb[0].mxu0
    %v311 = vadd.f32 0.0, %v310
    %v312 = vpop.f32.mrb[0].mxu0
    %313 = vmatprep.mubr.bf16.mxu0 0
    %314 = vmatmul.mubr.bf16.gmra.mrb[0].mxu0 %v238
    %v315 = vpop.f32.mrb[0].mxu0
    %v316 = vadd.f32 0.0, %v315
    %v317 = vpop.f32.mrb[0].mxu0
    %v318 = vpop.f32.mrb[0].mxu0
    %v319 = vadd.f32 0.0, %v318
    %v320 = vpop.f32.mrb[0].mxu0
    %321 = vmatprep.mubr.bf16.mxu0 0
    %322 = vmatmul.mubr.bf16.gmra.mrb[0].mxu0 %v241
    %v323 = vpop.f32.mrb[0].mxu0
    %v324 = vadd.f32 0.0, %v323
    %v325 = vpop.f32.mrb[0].mxu0
    %v326 = vpop.f32.mrb[0].mxu0
    %v327 = vadd.f32 0.0, %v326
    %v328 = vpop.f32.mrb[0].mxu0
    %329 = vmatprep.mubr.bf16.mxu0 0
    %330 = vmatmul.mubr.bf16.gmra.mrb[0].mxu0 %v244
    %v331 = vpop.f32.mrb[0].mxu0
    %v332 = vadd.f32 0.0, %v331
    %v333 = vpop.f32.mrb[0].mxu0
    %v334 = vpop.f32.mrb[0].mxu0
    %v335 = vadd.f32 0.0, %v334
    %v336 = vpop.f32.mrb[0].mxu0
    %337 = vmatprep.mubr.bf16.mxu0 0
    %338 = vmatmul.mubr.bf16.gmra.mrb[0].mxu0 %v247
    %v339 = vpop.f32.mrb[0].mxu0
    %v340 = vadd.f32 0.0, %v339
    %v341 = vpop.f32.mrb[0].mxu0
    %v342 = vpop.f32.mrb[0].mxu0
    %v343 = vadd.f32 0.0, %v342
    %v344 = vpop.f32.mrb[0].mxu0
    %345 = vdwg.mxu0
    %346 = vxpose.xlu0.c.b16.start [1/8] %v61, 128
    %347 = vxpose.xlu0.c.b16.cont [2/8] 0, 128
    %348 = vxpose.xlu0.c.b16.cont [3/8] 0, 128
    %349 = vxpose.xlu0.c.b16.cont [4/8] 0, 128
    %350 = vxpose.xlu0.c.b16.cont [5/8] 0, 128
    %351 = vxpose.xlu0.c.b16.cont [6/8] 0, 128
    %352 = vxpose.xlu0.c.b16.cont [7/8] 0, 128
    %353 = vxpose.xlu0.c.b16.end [8/8] 0, 128
    %v354 = vpop.trf.xlu0
    %v355 = vpop.trf.xlu0
    %v356 = vpop.trf.xlu0
    %v357 = vpop.trf.xlu0
    %v358 = vpop.trf.xlu0
    %v359 = vpop.trf.xlu0
    %v360 = vpop.trf.xlu0
    %v361 = vpop.trf.xlu0
    %v363 = vsel %vm87, %v354, 0
    %v366 = vsel %vm87, %v355, 0
    %v369 = vsel %vm87, %v356, 0
    %v372 = vsel %vm87, %v357, 0
    %v375 = vsel %vm87, %v358, 0
    %v378 = vsel %vm87, %v359, 0
    %v381 = vsel %vm87, %v360, 0
    %v384 = vsel %vm87, %v361, 0
    %386 = vmatprep.subr.bf16.mxu0 0
    %387 = vmatpush1.bf16.msra.mxu0 %v65
    %388 = vmatprep.subr.bf16.mxu0 0
    %389 = vmatpush1.bf16.msra.mxu0 0
    %390 = vmatprep.subr.bf16.mxu0 0
    %391 = vmatpush1.bf16.msra.mxu0 0
    %392 = vmatprep.subr.bf16.mxu0 0
    %393 = vmatpush1.bf16.msra.mxu0 0
    %394 = vmatprep.subr.bf16.mxu0 0
    %395 = vmatpush1.bf16.msra.mxu0 0
    %396 = vmatprep.subr.bf16.mxu0 0
    %397 = vmatpush1.bf16.msra.mxu0 0
    %398 = vmatprep.subr.bf16.mxu0 0
    %399 = vmatpush1.bf16.msra.mxu0 0
    %400 = vmatprep.subr.bf16.mxu0 0
    %401 = vmatpush1.bf16.msra.mxu0 0
    %402 = vmatprep.subr.bf16.mxu0 0
    %403 = vmatpush1.bf16.msra.mxu0 0
    %404 = vmatprep.subr.bf16.mxu0 0
    %405 = vmatpush1.bf16.msra.mxu0 0
    %406 = vmatprep.subr.bf16.mxu0 0
    %407 = vmatpush1.bf16.msra.mxu0 0
    %408 = vmatprep.subr.bf16.mxu0 0
    %409 = vmatpush1.bf16.msra.mxu0 0
    %410 = vmatprep.subr.bf16.mxu0 0
    %411 = vmatpush1.bf16.msra.mxu0 0
    %412 = vmatprep.subr.bf16.mxu0 0
    %413 = vmatpush1.bf16.msra.mxu0 0
    %414 = vmatprep.subr.bf16.mxu0 0
    %415 = vmatpush1.bf16.msra.mxu0 0
    %416 = vmatprep.subr.bf16.mxu0 0
    %417 = vmatpush1.bf16.msra.mxu0 0
    %418 = vmatprep.mubr.bf16.mxu0 0
    %419 = vmatmul.mubr.bf16.gmra.mrb[0].mxu0 %v363
    %v420 = vpop.f32.mrb[0].mxu0
    %v421 = vadd.f32 0.0, %v420
    %v422 = vpop.f32.mrb[0].mxu0
    %v423 = vpop.f32.mrb[0].mxu0
    %v424 = vadd.f32 0.0, %v423
    %v425 = vpop.f32.mrb[0].mxu0
    %426 = vmatprep.mubr.bf16.mxu0 0
    %427 = vmatmul.mubr.bf16.gmra.mrb[0].mxu0 %v366
    %v428 = vpop.f32.mrb[0].mxu0
    %v429 = vadd.f32 0.0, %v428
    %v430 = vpop.f32.mrb[0].mxu0
    %v431 = vpop.f32.mrb[0].mxu0
    %v432 = vadd.f32 0.0, %v431
    %v433 = vpop.f32.mrb[0].mxu0
    %434 = vmatprep.mubr.bf16.mxu0 0
    %435 = vmatmul.mubr.bf16.gmra.mrb[0].mxu0 %v369
    %v436 = vpop.f32.mrb[0].mxu0
    %v437 = vadd.f32 0.0, %v436
    %v438 = vpop.f32.mrb[0].mxu0
    %v439 = vpop.f32.mrb[0].mxu0
    %v440 = vadd.f32 0.0, %v439
    %v441 = vpop.f32.mrb[0].mxu0
    %442 = vmatprep.mubr.bf16.mxu0 0
    %443 = vmatmul.mubr.bf16.gmra.mrb[0].mxu0 %v372
    %v444 = vpop.f32.mrb[0].mxu0
    %v445 = vadd.f32 0.0, %v444
    %v446 = vpop.f32.mrb[0].mxu0
    %v447 = vpop.f32.mrb[0].mxu0
    %v448 = vadd.f32 0.0, %v447
    %v449 = vpop.f32.mrb[0].mxu0
    %450 = vmatprep.mubr.bf16.mxu0 0
    %451 = vmatmul.mubr.bf16.gmra.mrb[0].mxu0 %v375
    %v452 = vpop.f32.mrb[0].mxu0
    %v453 = vadd.f32 0.0, %v452
    %v454 = vpop.f32.mrb[0].mxu0
    %v455 = vpop.f32.mrb[0].mxu0
    %v456 = vadd.f32 0.0, %v455
    %v457 = vpop.f32.mrb[0].mxu0
    %458 = vmatprep.mubr.bf16.mxu0 0
    %459 = vmatmul.mubr.bf16.gmra.mrb[0].mxu0 %v378
    %v460 = vpop.f32.mrb[0].mxu0
    %v461 = vadd.f32 0.0, %v460
    %v462 = vpop.f32.mrb[0].mxu0
    %v463 = vpop.f32.mrb[0].mxu0
    %v464 = vadd.f32 0.0, %v463
    %v465 = vpop.f32.mrb[0].mxu0
    %466 = vmatprep.mubr.bf16.mxu0 0
    %467 = vmatmul.mubr.bf16.gmra.mrb[0].mxu0 %v381
    %v468 = vpop.f32.mrb[0].mxu0
    %v469 = vadd.f32 0.0, %v468
    %v470 = vpop.f32.mrb[0].mxu0
    %v471 = vpop.f32.mrb[0].mxu0
    %v472 = vadd.f32 0.0, %v471
    %v473 = vpop.f32.mrb[0].mxu0
    %474 = vmatprep.mubr.bf16.mxu0 0
    %475 = vmatmul.mubr.bf16.gmra.mrb[0].mxu0 %v384
    %v476 = vpop.f32.mrb[0].mxu0
    %v477 = vadd.f32 0.0, %v476
    %v478 = vpop.f32.mrb[0].mxu0
    %v479 = vpop.f32.mrb[0].mxu0
    %v480 = vadd.f32 0.0, %v479
    %v481 = vpop.f32.mrb[0].mxu0
    %482 = vdwg.mxu0
    %483 = vxpose.xlu0.c.b16.start [1/8] %v62, 128
    %484 = vxpose.xlu0.c.b16.cont [2/8] 0, 128
    %485 = vxpose.xlu0.c.b16.cont [3/8] 0, 128
    %486 = vxpose.xlu0.c.b16.cont [4/8] 0, 128
    %487 = vxpose.xlu0.c.b16.cont [5/8] 0, 128
    %488 = vxpose.xlu0.c.b16.cont [6/8] 0, 128
    %489 = vxpose.xlu0.c.b16.cont [7/8] 0, 128
    %490 = vxpose.xlu0.c.b16.end [8/8] 0, 128
    %v491 = vpop.trf.xlu0
    %v492 = vpop.trf.xlu0
    %v493 = vpop.trf.xlu0
    %v494 = vpop.trf.xlu0
    %v495 = vpop.trf.xlu0
    %v496 = vpop.trf.xlu0
    %v497 = vpop.trf.xlu0
    %v498 = vpop.trf.xlu0
    %v500 = vsel %vm87, %v491, 0
    %v503 = vsel %vm87, %v492, 0
    %v506 = vsel %vm87, %v493, 0
    %v509 = vsel %vm87, %v494, 0
    %v512 = vsel %vm87, %v495, 0
    %v515 = vsel %vm87, %v496, 0
    %v518 = vsel %vm87, %v497, 0
    %v521 = vsel %vm87, %v498, 0
    %523 = vmatprep.subr.bf16.mxu0 0
    %524 = vmatpush1.bf16.msra.mxu0 %v66
    %525 = vmatprep.subr.bf16.mxu0 0
    %526 = vmatpush1.bf16.msra.mxu0 0
    %527 = vmatprep.subr.bf16.mxu0 0
    %528 = vmatpush1.bf16.msra.mxu0 0
    %529 = vmatprep.subr.bf16.mxu0 0
    %530 = vmatpush1.bf16.msra.mxu0 0
    %531 = vmatprep.subr.bf16.mxu0 0
    %532 = vmatpush1.bf16.msra.mxu0 0
    %533 = vmatprep.subr.bf16.mxu0 0
    %534 = vmatpush1.bf16.msra.mxu0 0
    %535 = vmatprep.subr.bf16.mxu0 0
    %536 = vmatpush1.bf16.msra.mxu0 0
    %537 = vmatprep.subr.bf16.mxu0 0
    %538 = vmatpush1.bf16.msra.mxu0 0
    %539 = vmatprep.subr.bf16.mxu0 0
    %540 = vmatpush1.bf16.msra.mxu0 0
    %541 = vmatprep.subr.bf16.mxu0 0
    %542 = vmatpush1.bf16.msra.mxu0 0
    %543 = vmatprep.subr.bf16.mxu0 0
    %544 = vmatpush1.bf16.msra.mxu0 0
    %545 = vmatprep.subr.bf16.mxu0 0
    %546 = vmatpush1.bf16.msra.mxu0 0
    %547 = vmatprep.subr.bf16.mxu0 0
    %548 = vmatpush1.bf16.msra.mxu0 0
    %549 = vmatprep.subr.bf16.mxu0 0
    %550 = vmatpush1.bf16.msra.mxu0 0
    %551 = vmatprep.subr.bf16.mxu0 0
    %552 = vmatpush1.bf16.msra.mxu0 0
    %553 = vmatprep.subr.bf16.mxu0 0
    %554 = vmatpush1.bf16.msra.mxu0 0
    %555 = vmatprep.mubr.bf16.mxu0 0
    %556 = vmatmul.mubr.bf16.gmra.mrb[0].mxu0 %v500
    %v557 = vpop.f32.mrb[0].mxu0
    %v558 = vadd.f32 0.0, %v557
    %v559 = vpop.f32.mrb[0].mxu0
    %v560 = vpop.f32.mrb[0].mxu0
    %v561 = vadd.f32 0.0, %v560
    %v562 = vpop.f32.mrb[0].mxu0
    %563 = vmatprep.mubr.bf16.mxu0 0
    %564 = vmatmul.mubr.bf16.gmra.mrb[0].mxu0 %v503
    %v565 = vpop.f32.mrb[0].mxu0
    %v566 = vadd.f32 0.0, %v565
    %v567 = vpop.f32.mrb[0].mxu0
    %v568 = vpop.f32.mrb[0].mxu0
    %v569 = vadd.f32 0.0, %v568
    %v570 = vpop.f32.mrb[0].mxu0
    %571 = vmatprep.mubr.bf16.mxu0 0
    %572 = vmatmul.mubr.bf16.gmra.mrb[0].mxu0 %v506
    %v573 = vpop.f32.mrb[0].mxu0
    %v574 = vadd.f32 0.0, %v573
    %v575 = vpop.f32.mrb[0].mxu0
    %v576 = vpop.f32.mrb[0].mxu0
    %v577 = vadd.f32 0.0, %v576
    %v578 = vpop.f32.mrb[0].mxu0
    %579 = vmatprep.mubr.bf16.mxu0 0
    %580 = vmatmul.mubr.bf16.gmra.mrb[0].mxu0 %v509
    %v581 = vpop.f32.mrb[0].mxu0
    %v582 = vadd.f32 0.0, %v581
    %v583 = vpop.f32.mrb[0].mxu0
    %v584 = vpop.f32.mrb[0].mxu0
    %v585 = vadd.f32 0.0, %v584
    %v586 = vpop.f32.mrb[0].mxu0
    %587 = vmatprep.mubr.bf16.mxu0 0
    %588 = vmatmul.mubr.bf16.gmra.mrb[0].mxu0 %v512
    %v589 = vpop.f32.mrb[0].mxu0
    %v590 = vadd.f32 0.0, %v589
    %v591 = vpop.f32.mrb[0].mxu0
    %v592 = vpop.f32.mrb[0].mxu0
    %v593 = vadd.f32 0.0, %v592
    %v594 = vpop.f32.mrb[0].mxu0
    %595 = vmatprep.mubr.bf16.mxu0 0
    %596 = vmatmul.mubr.bf16.gmra.mrb[0].mxu0 %v515
    %v597 = vpop.f32.mrb[0].mxu0
    %v598 = vadd.f32 0.0, %v597
    %v599 = vpop.f32.mrb[0].mxu0
    %v600 = vpop.f32.mrb[0].mxu0
    %v601 = vadd.f32 0.0, %v600
    %v602 = vpop.f32.mrb[0].mxu0
    %603 = vmatprep.mubr.bf16.mxu0 0
    %604 = vmatmul.mubr.bf16.gmra.mrb[0].mxu0 %v518
    %v605 = vpop.f32.mrb[0].mxu0
    %v606 = vadd.f32 0.0, %v605
    %v607 = vpop.f32.mrb[0].mxu0
    %v608 = vpop.f32.mrb[0].mxu0
    %v609 = vadd.f32 0.0, %v608
    %v610 = vpop.f32.mrb[0].mxu0
    %611 = vmatprep.mubr.bf16.mxu0 0
    %612 = vmatmul.mubr.bf16.gmra.mrb[0].mxu0 %v521
    %v613 = vpop.f32.mrb[0].mxu0
    %v614 = vadd.f32 0.0, %v613
    %v615 = vpop.f32.mrb[0].mxu0
    %v616 = vpop.f32.mrb[0].mxu0
    %v617 = vadd.f32 0.0, %v616
    %v618 = vpop.f32.mrb[0].mxu0
    %619 = vdwg.mxu0
    %620 = vmax.xlane.f32.xlu0 %v147
    %v621 = vpop.xlane.xlu0 %620
    %622 = vmax.xlane.f32.xlu0 %v150
    %v623 = vpop.xlane.xlu0 %622
    %624 = vmax.xlane.f32.xlu0 %v155
    %v625 = vpop.xlane.xlu0 %624
    %626 = vmax.xlane.f32.xlu0 %v158
    %v627 = vpop.xlane.xlu0 %626
    %628 = vmax.xlane.f32.xlu0 %v163
    %v629 = vpop.xlane.xlu0 %628
    %630 = vmax.xlane.f32.xlu0 %v166
    %v631 = vpop.xlane.xlu0 %630
    %632 = vmax.xlane.f32.xlu0 %v171
    %v633 = vpop.xlane.xlu0 %632
    %634 = vmax.xlane.f32.xlu0 %v174
    %v635 = vpop.xlane.xlu0 %634
    %636 = vmax.xlane.f32.xlu0 %v179
    %v637 = vpop.xlane.xlu0 %636
    %638 = vmax.xlane.f32.xlu0 %v182
    %v639 = vpop.xlane.xlu0 %638
    %640 = vmax.xlane.f32.xlu0 %v187
    %v641 = vpop.xlane.xlu0 %640
    %642 = vmax.xlane.f32.xlu0 %v190
    %v643 = vpop.xlane.xlu0 %642
    %644 = vmax.xlane.f32.xlu0 %v195
    %v645 = vpop.xlane.xlu0 %644
    %646 = vmax.xlane.f32.xlu0 %v198
    %v647 = vpop.xlane.xlu0 %646
    %648 = vmax.xlane.f32.xlu0 %v203
    %v649 = vpop.xlane.xlu0 %648
    %650 = vmax.xlane.f32.xlu0 %v206
    %v651 = vpop.xlane.xlu0 %650
    %652 = vmax.xlane.f32.xlu0 %v284
    %v653 = vpop.xlane.xlu0 %652
    %654 = vmax.xlane.f32.xlu0 %v287
    %v655 = vpop.xlane.xlu0 %654
    %656 = vmax.xlane.f32.xlu0 %v292
    %v657 = vpop.xlane.xlu0 %656
    %658 = vmax.xlane.f32.xlu0 %v295
    %v659 = vpop.xlane.xlu0 %658
    %660 = vmax.xlane.f32.xlu0 %v300
    %v661 = vpop.xlane.xlu0 %660
    %662 = vmax.xlane.f32.xlu0 %v303
    %v663 = vpop.xlane.xlu0 %662
    %664 = vmax.xlane.f32.xlu0 %v308
    %v665 = vpop.xlane.xlu0 %664
    %666 = vmax.xlane.f32.xlu0 %v311
    %v667 = vpop.xlane.xlu0 %666
    %668 = vmax.xlane.f32.xlu0 %v316
    %v669 = vpop.xlane.xlu0 %668
    %670 = vmax.xlane.f32.xlu0 %v319
    %v671 = vpop.xlane.xlu0 %670
    %672 = vmax.xlane.f32.xlu0 %v324
    %v673 = vpop.xlane.xlu0 %672
    %674 = vmax.xlane.f32.xlu0 %v327
    %v675 = vpop.xlane.xlu0 %674
    %676 = vmax.xlane.f32.xlu0 %v332
    %v677 = vpop.xlane.xlu0 %676
    %678 = vmax.xlane.f32.xlu0 %v335
    %v679 = vpop.xlane.xlu0 %678
    %680 = vmax.xlane.f32.xlu0 %v340
    %v681 = vpop.xlane.xlu0 %680
    %682 = vmax.xlane.f32.xlu0 %v343
    %v683 = vpop.xlane.xlu0 %682
    %684 = vmax.xlane.f32.xlu0 %v421
    %v685 = vpop.xlane.xlu0 %684
    %686 = vmax.xlane.f32.xlu0 %v424
    %v687 = vpop.xlane.xlu0 %686
    %688 = vmax.xlane.f32.xlu0 %v429
    %v689 = vpop.xlane.xlu0 %688
    %690 = vmax.xlane.f32.xlu0 %v432
    %v691 = vpop.xlane.xlu0 %690
    %692 = vmax.xlane.f32.xlu0 %v437
    %v693 = vpop.xlane.xlu0 %692
    %694 = vmax.xlane.f32.xlu0 %v440
    %v695 = vpop.xlane.xlu0 %694
    %696 = vmax.xlane.f32.xlu0 %v445
    %v697 = vpop.xlane.xlu0 %696
    %698 = vmax.xlane.f32.xlu0 %v448
    %v699 = vpop.xlane.xlu0 %698
    %700 = vmax.xlane.f32.xlu0 %v453
    %v701 = vpop.xlane.xlu0 %700
    %702 = vmax.xlane.f32.xlu0 %v456
    %v703 = vpop.xlane.xlu0 %702
    %704 = vmax.xlane.f32.xlu0 %v461
    %v705 = vpop.xlane.xlu0 %704
    %706 = vmax.xlane.f32.xlu0 %v464
    %v707 = vpop.xlane.xlu0 %706
    %708 = vmax.xlane.f32.xlu0 %v469
    %v709 = vpop.xlane.xlu0 %708
    %710 = vmax.xlane.f32.xlu0 %v472
    %v711 = vpop.xlane.xlu0 %710
    %712 = vmax.xlane.f32.xlu0 %v477
    %v713 = vpop.xlane.xlu0 %712
    %714 = vmax.xlane.f32.xlu0 %v480
    %v715 = vpop.xlane.xlu0 %714
    %716 = vmax.xlane.f32.xlu0 %v558
    %v717 = vpop.xlane.xlu0 %716
    %718 = vmax.xlane.f32.xlu0 %v561
    %v719 = vpop.xlane.xlu0 %718
    %720 = vmax.xlane.f32.xlu0 %v566
    %v721 = vpop.xlane.xlu0 %720
    %722 = vmax.xlane.f32.xlu0 %v569
    %v723 = vpop.xlane.xlu0 %722
    %724 = vmax.xlane.f32.xlu0 %v574
    %v725 = vpop.xlane.xlu0 %724
    %726 = vmax.xlane.f32.xlu0 %v577
    %v727 = vpop.xlane.xlu0 %726
    %728 = vmax.xlane.f32.xlu0 %v582
    %v729 = vpop.xlane.xlu0 %728
    %730 = vmax.xlane.f32.xlu0 %v585
    %v731 = vpop.xlane.xlu0 %730
    %732 = vmax.xlane.f32.xlu0 %v590
    %v733 = vpop.xlane.xlu0 %732
    %734 = vmax.xlane.f32.xlu0 %v593
    %v735 = vpop.xlane.xlu0 %734
    %736 = vmax.xlane.f32.xlu0 %v598
    %v737 = vpop.xlane.xlu0 %736
    %738 = vmax.xlane.f32.xlu0 %v601
    %v739 = vpop.xlane.xlu0 %738
    %740 = vmax.xlane.f32.xlu0 %v606
    %v741 = vpop.xlane.xlu0 %740
    %742 = vmax.xlane.f32.xlu0 %v609
    %v743 = vpop.xlane.xlu0 %742
    %744 = vmax.xlane.f32.xlu0 %v614
    %v745 = vpop.xlane.xlu0 %744
    %746 = vmax.xlane.f32.xlu0 %v617
    %v747 = vpop.xlane.xlu0 %746
    %v748 = vsub.f32 %v147, %v621
    %v749 = vsub.f32 %v150, %v623
    %v750 = vsub.f32 %v155, %v625
    %v751 = vsub.f32 %v158, %v627
    %v752 = vsub.f32 %v163, %v629
    %v753 = vsub.f32 %v166, %v631
    %v754 = vsub.f32 %v171, %v633
    %v755 = vsub.f32 %v174, %v635
    %v756 = vsub.f32 %v179, %v637
    %v757 = vsub.f32 %v182, %v639
    %v758 = vsub.f32 %v187, %v641
    %v759 = vsub.f32 %v190, %v643
    %v760 = vsub.f32 %v195, %v645
    %v761 = vsub.f32 %v198, %v647
    %v762 = vsub.f32 %v203, %v649
    %v763 = vsub.f32 %v206, %v651
    %v764 = vsub.f32 %v284, %v653
    %v765 = vsub.f32 %v287, %v655
    %v766 = vsub.f32 %v292, %v657
    %v767 = vsub.f32 %v295, %v659
    %v768 = vsub.f32 %v300, %v661
    %v769 = vsub.f32 %v303, %v663
    %v770 = vsub.f32 %v308, %v665
    %v771 = vsub.f32 %v311, %v667
    %v772 = vsub.f32 %v316, %v669
    %v773 = vsub.f32 %v319, %v671
    %v774 = vsub.f32 %v324, %v673
    %v775 = vsub.f32 %v327, %v675
    %v776 = vsub.f32 %v332, %v677
    %v777 = vsub.f32 %v335, %v679
    %v778 = vsub.f32 %v340, %v681
    %v779 = vsub.f32 %v343, %v683
    %v780 = vsub.f32 %v421, %v685
    %v781 = vsub.f32 %v424, %v687
    %v782 = vsub.f32 %v429, %v689
    %v783 = vsub.f32 %v432, %v691
    %v784 = vsub.f32 %v437, %v693
    %v785 = vsub.f32 %v440, %v695
    %v786 = vsub.f32 %v445, %v697
    %v787 = vsub.f32 %v448, %v699
    %v788 = vsub.f32 %v453, %v701
    %v789 = vsub.f32 %v456, %v703
    %v790 = vsub.f32 %v461, %v705
    %v791 = vsub.f32 %v464, %v707
    %v792 = vsub.f32 %v469, %v709
    %v793 = vsub.f32 %v472, %v711
    %v794 = vsub.f32 %v477, %v713
    %v795 = vsub.f32 %v480, %v715
    %v796 = vsub.f32 %v558, %v717
    %v797 = vsub.f32 %v561, %v719
    %v798 = vsub.f32 %v566, %v721
    %v799 = vsub.f32 %v569, %v723
    %v800 = vsub.f32 %v574, %v725
    %v801 = vsub.f32 %v577, %v727
    %v802 = vsub.f32 %v582, %v729
    %v803 = vsub.f32 %v585, %v731
    %v804 = vsub.f32 %v590, %v733
    %v805 = vsub.f32 %v593, %v735
    %v806 = vsub.f32 %v598, %v737
    %v807 = vsub.f32 %v601, %v739
    %v808 = vsub.f32 %v606, %v741
    %v809 = vsub.f32 %v609, %v743
    %v810 = vsub.f32 %v614, %v745
    %v811 = vsub.f32 %v617, %v747
    %v812 = vmul.f32 %v748, 1.442695
    %v813 = vpow.pop %v812
    %v814 = vmul.f32 %v749, 1.442695
    %v815 = vpow.pop %v814
    %v816 = vmul.f32 %v750, 1.442695
    %v817 = vpow.pop %v816
    %v818 = vmul.f32 %v751, 1.442695
    %v819 = vpow.pop %v818
    %v820 = vmul.f32 %v752, 1.442695
    %v821 = vpow.pop %v820
    %v822 = vmul.f32 %v753, 1.442695
    %v823 = vpow.pop %v822
    %v824 = vmul.f32 %v754, 1.442695
    %v825 = vpow.pop %v824
    %v826 = vmul.f32 %v755, 1.442695
    %v827 = vpow.pop %v826
    %v828 = vmul.f32 %v756, 1.442695
    %v829 = vpow.pop %v828
    %v830 = vmul.f32 %v757, 1.442695
    %v831 = vpow.pop %v830
    %v832 = vmul.f32 %v758, 1.442695
    %v833 = vpow.pop %v832
    %v834 = vmul.f32 %v759, 1.442695
    %v835 = vpow.pop %v834
    %v836 = vmul.f32 %v760, 1.442695
    %v837 = vpow.pop %v836
    %v838 = vmul.f32 %v761, 1.442695
    %v839 = vpow.pop %v838
    %v840 = vmul.f32 %v762, 1.442695
    %v841 = vpow.pop %v840
    %v842 = vmul.f32 %v763, 1.442695
    %v843 = vpow.pop %v842
    %v844 = vmul.f32 %v764, 1.442695
    %v845 = vpow.pop %v844
    %v846 = vmul.f32 %v765, 1.442695
    %v847 = vpow.pop %v846
    %v848 = vmul.f32 %v766, 1.442695
    %v849 = vpow.pop %v848
    %v850 = vmul.f32 %v767, 1.442695
    %v851 = vpow.pop %v850
    %v852 = vmul.f32 %v768, 1.442695
    %v853 = vpow.pop %v852
    %v854 = vmul.f32 %v769, 1.442695
    %v855 = vpow.pop %v854
    %v856 = vmul.f32 %v770, 1.442695
    %v857 = vpow.pop %v856
    %v858 = vmul.f32 %v771, 1.442695
    %v859 = vpow.pop %v858
    %v860 = vmul.f32 %v772, 1.442695
    %v861 = vpow.pop %v860
    %v862 = vmul.f32 %v773, 1.442695
    %v863 = vpow.pop %v862
    %v864 = vmul.f32 %v774, 1.442695
    %v865 = vpow.pop %v864
    %v866 = vmul.f32 %v775, 1.442695
    %v867 = vpow.pop %v866
    %v868 = vmul.f32 %v776, 1.442695
    %v869 = vpow.pop %v868
    %v870 = vmul.f32 %v777, 1.442695
    %v871 = vpow.pop %v870
    %v872 = vmul.f32 %v778, 1.442695
    %v873 = vpow.pop %v872
    %v874 = vmul.f32 %v779, 1.442695
    %v875 = vpow.pop %v874
    %v876 = vmul.f32 %v780, 1.442695
    %v877 = vpow.pop %v876
    %v878 = vmul.f32 %v781, 1.442695
    %v879 = vpow.pop %v878
    %v880 = vmul.f32 %v782, 1.442695
    %v881 = vpow.pop %v880
    %v882 = vmul.f32 %v783, 1.442695
    %v883 = vpow.pop %v882
    %v884 = vmul.f32 %v784, 1.442695
    %v885 = vpow.pop %v884
    %v886 = vmul.f32 %v785, 1.442695
    %v887 = vpow.pop %v886
    %v888 = vmul.f32 %v786, 1.442695
    %v889 = vpow.pop %v888
    %v890 = vmul.f32 %v787, 1.442695
    %v891 = vpow.pop %v890
    %v892 = vmul.f32 %v788, 1.442695
    %v893 = vpow.pop %v892
    %v894 = vmul.f32 %v789, 1.442695
    %v895 = vpow.pop %v894
    %v896 = vmul.f32 %v790, 1.442695
    %v897 = vpow.pop %v896
    %v898 = vmul.f32 %v791, 1.442695
    %v899 = vpow.pop %v898
    %v900 = vmul.f32 %v792, 1.442695
    %v901 = vpow.pop %v900
    %v902 = vmul.f32 %v793, 1.442695
    %v903 = vpow.pop %v902
    %v904 = vmul.f32 %v794, 1.442695
    %v905 = vpow.pop %v904
    %v906 = vmul.f32 %v795, 1.442695
    %v907 = vpow.pop %v906
    %v908 = vmul.f32 %v796, 1.442695
    %v909 = vpow.pop %v908
    %v910 = vmul.f32 %v797, 1.442695
    %v911 = vpow.pop %v910
    %v912 = vmul.f32 %v798, 1.442695
    %v913 = vpow.pop %v912
    %v914 = vmul.f32 %v799, 1.442695
    %v915 = vpow.pop %v914
    %v916 = vmul.f32 %v800, 1.442695
    %v917 = vpow.pop %v916
    %v918 = vmul.f32 %v801, 1.442695
    %v919 = vpow.pop %v918
    %v920 = vmul.f32 %v802, 1.442695
    %v921 = vpow.pop %v920
    %v922 = vmul.f32 %v803, 1.442695
    %v923 = vpow.pop %v922
    %v924 = vmul.f32 %v804, 1.442695
    %v925 = vpow.pop %v924
    %v926 = vmul.f32 %v805, 1.442695
    %v927 = vpow.pop %v926
    %v928 = vmul.f32 %v806, 1.442695
    %v929 = vpow.pop %v928
    %v930 = vmul.f32 %v807, 1.442695
    %v931 = vpow.pop %v930
    %v932 = vmul.f32 %v808, 1.442695
    %v933 = vpow.pop %v932
    %v934 = vmul.f32 %v809, 1.442695
    %v935 = vpow.pop %v934
    %v936 = vmul.f32 %v810, 1.442695
    %v937 = vpow.pop %v936
    %v938 = vmul.f32 %v811, 1.442695
    %v939 = vpow.pop %v938
    %v940 = vpack.c.bf16 %v815, %v813
    %v941 = vpack.c.bf16 %v819, %v817
    %v942 = vpack.c.bf16 %v823, %v821
    %v943 = vpack.c.bf16 %v827, %v825
    %v944 = vpack.c.bf16 %v831, %v829
    %v945 = vpack.c.bf16 %v835, %v833
    %v946 = vpack.c.bf16 %v839, %v837
    %v947 = vpack.c.bf16 %v843, %v841
    %v948 = vpack.c.bf16 %v847, %v845
    %v949 = vpack.c.bf16 %v851, %v849
    %v950 = vpack.c.bf16 %v855, %v853
    %v951 = vpack.c.bf16 %v859, %v857
    %v952 = vpack.c.bf16 %v863, %v861
    %v953 = vpack.c.bf16 %v867, %v865
    %v954 = vpack.c.bf16 %v871, %v869
    %v955 = vpack.c.bf16 %v875, %v873
    %v956 = vpack.c.bf16 %v879, %v877
    %v957 = vpack.c.bf16 %v883, %v881
    %v958 = vpack.c.bf16 %v887, %v885
    %v959 = vpack.c.bf16 %v891, %v889
    %v960 = vpack.c.bf16 %v895, %v893
    %v961 = vpack.c.bf16 %v899, %v897
    %v962 = vpack.c.bf16 %v903, %v901
    %v963 = vpack.c.bf16 %v907, %v905
    %v964 = vpack.c.bf16 %v911, %v909
    %v965 = vpack.c.bf16 %v915, %v913
    %v966 = vpack.c.bf16 %v919, %v917
    %v967 = vpack.c.bf16 %v923, %v921
    %v968 = vpack.c.bf16 %v927, %v925
    %v969 = vpack.c.bf16 %v931, %v929
    %v970 = vpack.c.bf16 %v935, %v933
    %v971 = vpack.c.bf16 %v939, %v937
    %972 = vmatprep.subr.bf16.mxu0 0
    %973 = vmatpush1.bf16.xpose.msra.mxu0 %v940
    %974 = vmatprep.subr.bf16.mxu0 0
    %975 = vmatpush1.bf16.xpose.msra.mxu0 %v941
    %976 = vmatprep.subr.bf16.mxu0 0
    %977 = vmatpush1.bf16.xpose.msra.mxu0 %v942
    %978 = vmatprep.subr.bf16.mxu0 0
    %979 = vmatpush1.bf16.xpose.msra.mxu0 %v943
    %980 = vmatprep.subr.bf16.mxu0 0
    %981 = vmatpush1.bf16.xpose.msra.mxu0 %v944
    %982 = vmatprep.subr.bf16.mxu0 0
    %983 = vmatpush1.bf16.xpose.msra.mxu0 %v945
    %984 = vmatprep.subr.bf16.mxu0 0
    %985 = vmatpush1.bf16.xpose.msra.mxu0 %v946
    %986 = vmatprep.subr.bf16.mxu0 0
    %987 = vmatpush1.bf16.xpose.msra.mxu0 %v947
    %988 = vmatprep.subr.bf16.mxu0 0
    %989 = vmatpush1.bf16.xpose.msra.mxu0 0
    %990 = vmatprep.subr.bf16.mxu0 0
    %991 = vmatpush1.bf16.xpose.msra.mxu0 0
    %992 = vmatprep.subr.bf16.mxu0 0
    %993 = vmatpush1.bf16.xpose.msra.mxu0 0
    %994 = vmatprep.subr.bf16.mxu0 0
    %995 = vmatpush1.bf16.xpose.msra.mxu0 0
    %996 = vmatprep.subr.bf16.mxu0 0
    %997 = vmatpush1.bf16.xpose.msra.mxu0 0
    %998 = vmatprep.subr.bf16.mxu0 0
    %999 = vmatpush1.bf16.xpose.msra.mxu0 0
    %1000 = vmatprep.subr.bf16.mxu0 0
    %1001 = vmatpush1.bf16.xpose.msra.mxu0 0
    %1002 = vmatprep.subr.bf16.mxu0 0
    %1003 = vmatpush1.bf16.xpose.msra.mxu0 0
    %1004 = vmatprep.mubr.bf16.mxu0 0
    %1005 = vmatmul.mubr.bf16.gmra.mrb[0].mxu0 %v67
    %v1006 = vpop.f32.mrb[0].mxu0
    %v1007 = vadd.f32 0.0, %v1006
    %v1008 = vpop.f32.mrb[0].mxu0
    %v1009 = vpop.f32.mrb[0].mxu0
    %v1010 = vadd.f32 0.0, %v1009
    %v1011 = vpop.f32.mrb[0].mxu0
    %1012 = vmatprep.mubr.bf16.mxu0 0
    %1013 = vmatmul.mubr.bf16.gmra.mrb[0].mxu0 1065369472
    %v1014 = vpop.f32.mrb[0].mxu0
    %v1015 = vadd.f32 0.0, %v1014
    %v1016 = vpop.f32.mrb[0].mxu0
    %v1017 = vpop.f32.mrb[0].mxu0
    %v1018 = vpop.f32.mrb[0].mxu0
    %1019 = vdwg.mxu0
    %1020 = vmatprep.subr.bf16.mxu0 0
    %1021 = vmatpush1.bf16.xpose.msra.mxu0 %v948
    %1022 = vmatprep.subr.bf16.mxu0 0
    %1023 = vmatpush1.bf16.xpose.msra.mxu0 %v949
    %1024 = vmatprep.subr.bf16.mxu0 0
    %1025 = vmatpush1.bf16.xpose.msra.mxu0 %v950
    %1026 = vmatprep.subr.bf16.mxu0 0
    %1027 = vmatpush1.bf16.xpose.msra.mxu0 %v951
    %1028 = vmatprep.subr.bf16.mxu0 0
    %1029 = vmatpush1.bf16.xpose.msra.mxu0 %v952
    %1030 = vmatprep.subr.bf16.mxu0 0
    %1031 = vmatpush1.bf16.xpose.msra.mxu0 %v953
    %1032 = vmatprep.subr.bf16.mxu0 0
    %1033 = vmatpush1.bf16.xpose.msra.mxu0 %v954
    %1034 = vmatprep.subr.bf16.mxu0 0
    %1035 = vmatpush1.bf16.xpose.msra.mxu0 %v955
    %1036 = vmatprep.subr.bf16.mxu0 0
    %1037 = vmatpush1.bf16.xpose.msra.mxu0 0
    %1038 = vmatprep.subr.bf16.mxu0 0
    %1039 = vmatpush1.bf16.xpose.msra.mxu0 0
    %1040 = vmatprep.subr.bf16.mxu0 0
    %1041 = vmatpush1.bf16.xpose.msra.mxu0 0
    %1042 = vmatprep.subr.bf16.mxu0 0
    %1043 = vmatpush1.bf16.xpose.msra.mxu0 0
    %1044 = vmatprep.subr.bf16.mxu0 0
    %1045 = vmatpush1.bf16.xpose.msra.mxu0 0
    %1046 = vmatprep.subr.bf16.mxu0 0
    %1047 = vmatpush1.bf16.xpose.msra.mxu0 0
    %1048 = vmatprep.subr.bf16.mxu0 0
    %1049 = vmatpush1.bf16.xpose.msra.mxu0 0
    %1050 = vmatprep.subr.bf16.mxu0 0
    %1051 = vmatpush1.bf16.xpose.msra.mxu0 0
    %1052 = vmatprep.mubr.bf16.mxu0 0
    %1053 = vmatmul.mubr.bf16.gmra.mrb[0].mxu0 %v68
    %v1054 = vpop.f32.mrb[0].mxu0
    %v1055 = vadd.f32 0.0, %v1054
    %v1056 = vpop.f32.mrb[0].mxu0
    %v1057 = vpop.f32.mrb[0].mxu0
    %v1058 = vadd.f32 0.0, %v1057
    %v1059 = vpop.f32.mrb[0].mxu0
    %1060 = vmatprep.mubr.bf16.mxu0 0
    %1061 = vmatmul.mubr.bf16.gmra.mrb[0].mxu0 1065369472
    %v1062 = vpop.f32.mrb[0].mxu0
    %v1063 = vadd.f32 0.0, %v1062
    %v1064 = vpop.f32.mrb[0].mxu0
    %v1065 = vpop.f32.mrb[0].mxu0
    %v1066 = vpop.f32.mrb[0].mxu0
    %1067 = vdwg.mxu0
    %1068 = vmatprep.subr.bf16.mxu0 0
    %1069 = vmatpush1.bf16.xpose.msra.mxu0 %v956
    %1070 = vmatprep.subr.bf16.mxu0 0
    %1071 = vmatpush1.bf16.xpose.msra.mxu0 %v957
    %1072 = vmatprep.subr.bf16.mxu0 0
    %1073 = vmatpush1.bf16.xpose.msra.mxu0 %v958
    %1074 = vmatprep.subr.bf16.mxu0 0
    %1075 = vmatpush1.bf16.xpose.msra.mxu0 %v959
    %1076 = vmatprep.subr.bf16.mxu0 0
    %1077 = vmatpush1.bf16.xpose.msra.mxu0 %v960
    %1078 = vmatprep.subr.bf16.mxu0 0
    %1079 = vmatpush1.bf16.xpose.msra.mxu0 %v961
    %1080 = vmatprep.subr.bf16.mxu0 0
    %1081 = vmatpush1.bf16.xpose.msra.mxu0 %v962
    %1082 = vmatprep.subr.bf16.mxu0 0
    %1083 = vmatpush1.bf16.xpose.msra.mxu0 %v963
    %1084 = vmatprep.subr.bf16.mxu0 0
    %1085 = vmatpush1.bf16.xpose.msra.mxu0 0
    %1086 = vmatprep.subr.bf16.mxu0 0
    %1087 = vmatpush1.bf16.xpose.msra.mxu0 0
    %1088 = vmatprep.subr.bf16.mxu0 0
    %1089 = vmatpush1.bf16.xpose.msra.mxu0 0
    %1090 = vmatprep.subr.bf16.mxu0 0
    %1091 = vmatpush1.bf16.xpose.msra.mxu0 0
    %1092 = vmatprep.subr.bf16.mxu0 0
    %1093 = vmatpush1.bf16.xpose.msra.mxu0 0
    %1094 = vmatprep.subr.bf16.mxu0 0
    %1095 = vmatpush1.bf16.xpose.msra.mxu0 0
    %1096 = vmatprep.subr.bf16.mxu0 0
    %1097 = vmatpush1.bf16.xpose.msra.mxu0 0
    %1098 = vmatprep.subr.bf16.mxu0 0
    %1099 = vmatpush1.bf16.xpose.msra.mxu0 0
    %1100 = vmatprep.mubr.bf16.mxu0 0
    %1101 = vmatmul.mubr.bf16.gmra.mrb[0].mxu0 %v69
    %v1102 = vpop.f32.mrb[0].mxu0
    %v1103 = vadd.f32 0.0, %v1102
    %v1104 = vpop.f32.mrb[0].mxu0
    %v1105 = vpop.f32.mrb[0].mxu0
    %v1106 = vadd.f32 0.0, %v1105
    %v1107 = vpop.f32.mrb[0].mxu0
    %1108 = vmatprep.mubr.bf16.mxu0 0
    %1109 = vmatmul.mubr.bf16.gmra.mrb[0].mxu0 1065369472
    %v1110 = vpop.f32.mrb[0].mxu0
    %v1111 = vadd.f32 0.0, %v1110
    %v1112 = vpop.f32.mrb[0].mxu0
    %v1113 = vpop.f32.mrb[0].mxu0
    %v1114 = vpop.f32.mrb[0].mxu0
    %1115 = vdwg.mxu0
    %1116 = vmatprep.subr.bf16.mxu0 0
    %1117 = vmatpush1.bf16.xpose.msra.mxu0 %v964
    %1118 = vmatprep.subr.bf16.mxu0 0
    %1119 = vmatpush1.bf16.xpose.msra.mxu0 %v965
    %1120 = vmatprep.subr.bf16.mxu0 0
    %1121 = vmatpush1.bf16.xpose.msra.mxu0 %v966
    %1122 = vmatprep.subr.bf16.mxu0 0
    %1123 = vmatpush1.bf16.xpose.msra.mxu0 %v967
    %1124 = vmatprep.subr.bf16.mxu0 0
    %1125 = vmatpush1.bf16.xpose.msra.mxu0 %v968
    %1126 = vmatprep.subr.bf16.mxu0 0
    %1127 = vmatpush1.bf16.xpose.msra.mxu0 %v969
    %1128 = vmatprep.subr.bf16.mxu0 0
    %1129 = vmatpush1.bf16.xpose.msra.mxu0 %v970
    %1130 = vmatprep.subr.bf16.mxu0 0
    %1131 = vmatpush1.bf16.xpose.msra.mxu0 %v971
    %1132 = vmatprep.subr.bf16.mxu0 0
    %1133 = vmatpush1.bf16.xpose.msra.mxu0 0
    %1134 = vmatprep.subr.bf16.mxu0 0
    %1135 = vmatpush1.bf16.xpose.msra.mxu0 0
    %1136 = vmatprep.subr.bf16.mxu0 0
    %1137 = vmatpush1.bf16.xpose.msra.mxu0 0
    %1138 = vmatprep.subr.bf16.mxu0 0
    %1139 = vmatpush1.bf16.xpose.msra.mxu0 0
    %1140 = vmatprep.subr.bf16.mxu0 0
    %1141 = vmatpush1.bf16.xpose.msra.mxu0 0
    %1142 = vmatprep.subr.bf16.mxu0 0
    %1143 = vmatpush1.bf16.xpose.msra.mxu0 0
    %1144 = vmatprep.subr.bf16.mxu0 0
    %1145 = vmatpush1.bf16.xpose.msra.mxu0 0
    %1146 = vmatprep.subr.bf16.mxu0 0
    %1147 = vmatpush1.bf16.xpose.msra.mxu0 0
    %1148 = vmatprep.mubr.bf16.mxu0 0
    %1149 = vmatmul.mubr.bf16.gmra.mrb[0].mxu0 %v70
    %v1150 = vpop.f32.mrb[0].mxu0
    %v1151 = vadd.f32 0.0, %v1150
    %v1152 = vpop.f32.mrb[0].mxu0
    %v1153 = vpop.f32.mrb[0].mxu0
    %v1154 = vadd.f32 0.0, %v1153
    %v1155 = vpop.f32.mrb[0].mxu0
    %1156 = vmatprep.mubr.bf16.mxu0 0
    %1157 = vmatmul.mubr.bf16.gmra.mrb[0].mxu0 1065369472
    %v1158 = vpop.f32.mrb[0].mxu0
    %v1159 = vadd.f32 0.0, %v1158
    %v1160 = vpop.f32.mrb[0].mxu0
    %v1161 = vpop.f32.mrb[0].mxu0
    %v1162 = vpop.f32.mrb[0].mxu0
    %1163 = vdwg.mxu0
    %v1164 = vrcp.pop %v1015
    %v1165 = vrcp.pop %v1063
    %v1166 = vrcp.pop %v1111
    %v1167 = vrcp.pop %v1159
    %v1168 = vlaneseq
    %v1169 = vshrl.u32 %v1168, 7
    %v1170 = vsub.s32 0, %v1169
    %v1171 = vrot.slane %v1164, %v1170
    %v1172 = vlaneseq
    %v1173 = vshrl.u32 %v1172, 7
    %v1174 = vsub.s32 0, %v1173
    %v1175 = vrot.slane %v1165, %v1174
    %v1176 = vlaneseq
    %v1177 = vshrl.u32 %v1176, 7
    %v1178 = vsub.s32 0, %v1177
    %v1179 = vrot.slane %v1166, %v1178
    %v1180 = vlaneseq
    %v1181 = vshrl.u32 %v1180, 7
    %v1182 = vsub.s32 0, %v1181
    %v1183 = vrot.slane %v1167, %v1182
    %v1184 = vmul.f32 %v1007, %v1171
    %v1185 = vmul.f32 %v1010, %v1171
    %v1186 = vmul.f32 %v1055, %v1175
    %v1187 = vmul.f32 %v1058, %v1175
    %v1188 = vmul.f32 %v1103, %v1179
    %v1189 = vmul.f32 %v1106, %v1179
    %v1190 = vmul.f32 %v1151, %v1183
    %v1191 = vmul.f32 %v1154, %v1183
    %1192 = vst [vmem:[#allocation5] sm:$0xff] %v1184
    %1193 = vst [vmem:[#allocation5 + $0x8] sm:$0xff] %v1185
    %1194 = vst [vmem:[#allocation5 + $0x10] sm:$0xff] %v1186
    %1195 = vst [vmem:[#allocation5 + $0x18] sm:$0xff] %v1187
    %1196 = vst [vmem:[#allocation5 + $0x20] sm:$0xff] %v1188
    %1197 = vst [vmem:[#allocation5 + $0x28] sm:$0xff] %v1189
    %1198 = vst [vmem:[#allocation5 + $0x30] sm:$0xff] %v1190
    %1199 = vst [vmem:[#allocation5 + $0x38] sm:$0xff] %v1191
    // Predicated region
    $region10: #{tpu_custom_call.1} parent=1 // pred_check
      _
    $region11: #{tpu_custom_call.1} parent=1 // pred_check_branch
      %1201 = sbr.rel (0) target = $region13
    $region12: #{tpu_custom_call.1} parent=1 // pred_region
      %s1203 = ssub.s32 1024, 1024
      %1204 = vsyncadd [#allocation4], %s1203
      %s1205 = sshll.u32 [#allocation5], 4
      %s1206 = int_to_ptr.vmem [resolvable:$true] %s1205
      %1211 = dma.vmem_to_hbm [thread:$0]  %s1206, 1024, %s1, [#allocation4], 128, 128, 8
    $region13: #{tpu_custom_call.1} parent=1 // pred_fallthru
      _
    // Predicated region
    $region14: #{tpu_custom_call.1} parent=1 // pred_check
      _
    $region15: #{tpu_custom_call.1} parent=1 // pred_check_branch
      %1213 = sbr.rel (0) target = $region17
    $region16: #{tpu_custom_call.1} parent=1 // pred_region
      %1214 = dma.done [#allocation4], 1024
    $region17: #{tpu_custom_call.1} parent=1 // pred_fallthru
      _
    %1215 = vsyncpa [#allocation3], 1
    %1216 = vsyncpa [#allocation4], 1

</llo_original>
